<compile_context>
chip_gen: v5e
topology: v5e:2x2
jax: 0.10.0
libtpu: 0.0.40
codegen_flags: <defaults>
</compile_context>

<pallas_src>
import jax
import jax.numpy as jnp
from jax.experimental import pallas as pl
from jax.experimental.pallas import tpu as pltpu


def _normalize_kernel(scale_ref, shift_ref, img_ref, out_ref):
    # scale/shift: (1, C, 1, 1) float32 — lane/sublane splat broadcast over the
    # (bn, C, th, W) image block.  out = img * (1/std) + (-mean/std).
    x = img_ref[...].astype(jnp.float32)
    out_ref[...] = (x * scale_ref[...] + shift_ref[...]).astype(out_ref.dtype)


def _tuning():
    """(target block bytes, vmem_limit_bytes or None) per detected TPU generation."""
    try:
        kind = jax.devices()[0].device_kind.lower()
    except Exception:
        kind = ""
    if "v6" in kind or "v7" in kind:
        # 32 MiB scoped default (64+ MiB physical): bigger blocks + raised limit
        # keep the ~0.35 us per-grid-step overhead negligible at 1.4-3.2 TB/s.
        return 6 << 20, 48 << 20
    # Conservative default: 4 x 3 MiB (double-buffered in + out) fits v5e's
    # 16 MiB scoped-VMEM default with headroom, and is already ~85% of roofline.
    return 3 << 20, None


def _choose_blocks(N, C, H, W, itemsize, target_block_bytes, min_steps=8):
    """Pick (bn, th) for blocks of shape (bn, C, th, W).

    Legality: th is a multiple of 8 or equals H; W is always the full last dim.
    Budget: block VMEM footprint uses the lane-padded width (multiple of 128).
    """
    lane_w = pl.cdiv(W, 128) * 128            # VMEM lane footprint of the W axis
    row_bytes = C * lane_w * itemsize         # one (1, C, 1, W) slice in VMEM

    # --- H tiling (sublane axis). --------------------------------------------
    if H * row_bytes <= target_block_bytes:
        th = H                                # full H (always legal)
    else:
        th = max(8, (target_block_bytes // (row_bytes * 8)) * 8)
        th = min(th, (H // 8) * 8 if H >= 8 else H)
        th = max(th, min(H, 8))
        # NOTE: for extreme C*W (one 8-row stripe > budget) th stays at 8 and
        # the block may exceed the target; W-tiling is not implemented since no
        # realistic image shape needs it.

    # --- batch tiling on top of a full-H tile. --------------------------------
    if th == H:
        bn = max(1, target_block_bytes // (H * row_bytes))
        bn = min(bn, N)
        while bn > 1 and N % bn != 0:         # prefer a divisor of N (no ragged block)
            bn -= 1
    else:
        bn = 1

    # --- ensure enough grid steps to pipeline / feed both v7x TensorCores, ----
    # --- without shrinking blocks below ~1 MiB. -------------------------------
    min_block_bytes = 1 << 20

    def steps(bn_, th_):
        return pl.cdiv(N, bn_) * pl.cdiv(H, th_)

    def block_bytes(bn_, th_):
        return bn_ * C * th_ * lane_w * itemsize

    total_bytes = N * H * row_bytes
    if total_bytes >= min_steps * min_block_bytes:
        while (steps(bn, th) < min_steps and bn > 1
               and block_bytes(max(1, bn // 2), th) >= min_block_bytes):
            bn = max(1, bn // 2)
        while (steps(bn, th) < min_steps and th > 8 and (th // 2) % 8 == 0
               and block_bytes(bn, th // 2) >= min_block_bytes):
            th //= 2

    return bn, th


def normalization_forward(img, mean, std, *, donate_input=False):
    """img: (N, C, H, W); mean/std: (C,) -> (img - mean) / std broadcast over C."""
    N, C, H, W = img.shape
    dtype = img.dtype
    itemsize = jnp.dtype(dtype).itemsize

    # Per-channel affine constants, kept in float32 inside the kernel.
    inv_std = 1.0 / jnp.asarray(std, dtype=jnp.float32)
    scale = inv_std.reshape(1, C, 1, 1)
    shift = (-jnp.asarray(mean, dtype=jnp.float32) * inv_std).reshape(1, C, 1, 1)

    target_block_bytes, vmem_limit = _tuning()
    bn, th = _choose_blocks(N, C, H, W, itemsize, target_block_bytes)
    grid = (pl.cdiv(N, bn), pl.cdiv(H, th))

    compiler_kwargs = dict(dimension_semantics=("parallel", "parallel"))
    if vmem_limit is not None:
        compiler_kwargs["vmem_limit_bytes"] = vmem_limit

    nbytes = N * C * H * W * itemsize
    out = pl.pallas_call(
        _normalize_kernel,
        out_shape=jax.ShapeDtypeStruct((N, C, H, W), dtype),
        grid_spec=pltpu.PrefetchScalarGridSpec(
            num_scalar_prefetch=0,
            grid=grid,
            in_specs=[
                pl.BlockSpec((1, C, 1, 1), lambda n, h: (0, 0, 0, 0)),     # 1/std
                pl.BlockSpec((1, C, 1, 1), lambda n, h: (0, 0, 0, 0)),     # -mean/std
                pl.BlockSpec((bn, C, th, W), lambda n, h: (n, 0, h, 0)),   # img block
            ],
            out_specs=pl.BlockSpec((bn, C, th, W), lambda n, h: (n, 0, h, 0)),
        ),
        compiler_params=pltpu.CompilerParams(**compiler_kwargs),
        cost_estimate=pl.CostEstimate(
            flops=2 * N * C * H * W,
            bytes_accessed=2 * nbytes + 2 * C * 4,
            transcendentals=0,
        ),
        # Donating img halves peak HBM footprint when the caller no longer
        # needs it (dtypes/shapes match exactly).  Off by default so the
        # self-check below can still read `img`.
        input_output_aliases=({2: 0} if donate_input else {}),
    )(scale, shift, img)
    return out


if __name__ == "__main__":
    # Deterministic parameter setup (mimics Normalization(mean, std).__init__).
    N, C, H, W = 2, 4, 16, 16
    mean = jnp.array([0.485, 0.456, 0.406, 0.5], dtype=jnp.float32)
    std = jnp.array([0.229, 0.224, 0.225, 0.25], dtype=jnp.float32)

    key = jax.random.PRNGKey(0)
    img = jax.random.uniform(key, (N, C, H, W), dtype=jnp.float32)

    out = jax.block_until_ready(normalization_forward(img, mean, std))

    # Reference check in plain JAX (same broadcasting semantics as PyTorch).
    ref = (img - mean.reshape(-1, 1, 1)) / std.reshape(-1, 1, 1)
    assert out.shape == (N, C, H, W)
    # (fused scale+shift with a reciprocal differs from divide by a few ulps)
    assert jnp.allclose(out, ref, atol=1e-5, rtol=1e-5)

    print("KERNEL_OK")
</pallas_src>

<mosaic_0001>
module attributes {stable_mosaic.version = 11 : i64} {
  func.func @_normalize_kernel(%arg0: i32, %arg1: i32, %arg2: memref<1x4x1x1xf32, #tpu.memory_space<vmem>>, %arg3: memref<1x4x1x1xf32, #tpu.memory_space<vmem>>, %arg4: memref<2x4x16x16xf32, #tpu.memory_space<vmem>>, %arg5: memref<2x4x16x16xf32, #tpu.memory_space<vmem>>) attributes {dimension_semantics = [#tpu.dimension_semantics<parallel>, #tpu.dimension_semantics<parallel>], iteration_bounds = array<i64: 1, 1>, scalar_prefetch = 0 : i64, scratch_operands = 0 : i64, tpu.core_type = #tpu.core_type<tc>, window_params = [{pipeline_mode = #tpu.pipeline_mode<synchronous>, transform_indices = @transform_0, window_bounds = array<i64: 1, 4, 1, 1>}, {pipeline_mode = #tpu.pipeline_mode<synchronous>, transform_indices = @transform_1, window_bounds = array<i64: 1, 4, 1, 1>}, {transform_indices = @transform_2, window_bounds = array<i64: 2, 4, 16, 16>}, {transform_indices = @transform_3, window_bounds = array<i64: 2, 4, 16, 16>}]} {
    %c0 = arith.constant 0 : index
    %c0_0 = arith.constant 0 : index
    %c0_1 = arith.constant 0 : index
    %c0_2 = arith.constant 0 : index
    %0 = vector.load %arg4[%c0, %c0_0, %c0_1, %c0_2] : memref<2x4x16x16xf32, #tpu.memory_space<vmem>>, vector<2x4x16x16xf32>
    %c0_3 = arith.constant 0 : index
    %c0_4 = arith.constant 0 : index
    %c0_5 = arith.constant 0 : index
    %c0_6 = arith.constant 0 : index
    %1 = vector.load %arg2[%c0_3, %c0_4, %c0_5, %c0_6] : memref<1x4x1x1xf32, #tpu.memory_space<vmem>>, vector<1x4x1x1xf32>
    %2 = vector.broadcast %1 : vector<1x4x1x1xf32> to vector<2x4x16x16xf32>
    %3 = arith.mulf %0, %2 : vector<2x4x16x16xf32>
    %c0_7 = arith.constant 0 : index
    %c0_8 = arith.constant 0 : index
    %c0_9 = arith.constant 0 : index
    %c0_10 = arith.constant 0 : index
    %4 = vector.load %arg3[%c0_7, %c0_8, %c0_9, %c0_10] : memref<1x4x1x1xf32, #tpu.memory_space<vmem>>, vector<1x4x1x1xf32>
    %5 = vector.broadcast %4 : vector<1x4x1x1xf32> to vector<2x4x16x16xf32>
    %6 = arith.addf %3, %5 : vector<2x4x16x16xf32>
    %c0_11 = arith.constant 0 : index
    %c0_12 = arith.constant 0 : index
    %c0_13 = arith.constant 0 : index
    %c0_14 = arith.constant 0 : index
    %7 = vector.load %arg5[%c0_11, %c0_12, %c0_13, %c0_14] : memref<2x4x16x16xf32, #tpu.memory_space<vmem>>, vector<2x4x16x16xf32>
    tpu.vector_store %arg5[%c0_11, %c0_12, %c0_13, %c0_14], %6 {strides = array<i32>} : memref<2x4x16x16xf32, #tpu.memory_space<vmem>>, vector<2x4x16x16xf32>,
    return
  }
  func.func @transform_0(%arg0: i32, %arg1: i32) -> (i32, i32, i32, i32) {
    %c0_i32 = arith.constant 0 : i32
    %c0_i32_0 = arith.constant 0 : i32
    %c0_i32_1 = arith.constant 0 : i32
    %c0_i32_2 = arith.constant 0 : i32
    %c0_i32_3 = arith.constant 0 : i32
    return %c0_i32, %c0_i32_0, %c0_i32_1, %c0_i32_2 : i32, i32, i32, i32
  }
  func.func @transform_1(%arg0: i32, %arg1: i32) -> (i32, i32, i32, i32) {
    %c0_i32 = arith.constant 0 : i32
    %c0_i32_0 = arith.constant 0 : i32
    %c0_i32_1 = arith.constant 0 : i32
    %c0_i32_2 = arith.constant 0 : i32
    %c0_i32_3 = arith.constant 0 : i32
    return %c0_i32, %c0_i32_0, %c0_i32_1, %c0_i32_2 : i32, i32, i32, i32
  }
  func.func @transform_2(%arg0: i32, %arg1: i32) -> (i32, i32, i32, i32) {
    %c0_i32 = arith.constant 0 : i32
    %c0_i32_0 = arith.constant 0 : i32
    %c0_i32_1 = arith.constant 0 : i32
    return %arg0, %c0_i32, %arg1, %c0_i32_0 : i32, i32, i32, i32
  }
  func.func @transform_3(%arg0: i32, %arg1: i32) -> (i32, i32, i32, i32) {
    %c0_i32 = arith.constant 0 : i32
    %c0_i32_0 = arith.constant 0 : i32
    %c0_i32_1 = arith.constant 0 : i32
    return %arg0, %c0_i32, %arg1, %c0_i32_0 : i32, i32, i32, i32
  }
}

</mosaic_0001>

<llo_original>
// kernel: tpu_custom_call.1
$region0: #{tpu_custom_call.1}
  #allocation0 [shape = 'u32[]', space=smem, size = 0x4, offset = 0x4, fixed_abs, tag = 'smem constant byte address 0x4 - core index']
  #allocation1 [shape = 'u32[72,128]{1,0:T(1,128)}', space=vmem, size = 0x9000, scoped, tag = 'internal scratch']
  %s0 = inlined_call_operand.vmem [shape: f32[1,4,1,1], index: 0, kind: input, shape index: {}]
  %s1 = inlined_call_operand.vmem [shape: f32[1,4,1,1], index: 1, kind: input, shape index: {}]
  %s2 = inlined_call_operand.hbm [shape: f32[2,4,16,16], index: 2, kind: input, shape index: {}]
  %s3 = inlined_call_operand.hbm [shape: f32[2,4,16,16], index: 3, kind: output, shape index: {}]
  %s4 = sld [smem:[#allocation0]]
  $region26: #{tpu_custom_call.1} parent=0
    _
  %s6 = ssub.s32 1, %s4
  %s7 = scalar_select 0, %s6, %s4
  $region1: #{tpu_custom_call.1} parent=0
    #allocation2 [shape = 'u8[65536]{0}', space=vmem, size = 0x10000, scoped, tag = 'input window, operand 2, single buffered']
    #allocation3 [shape = 's32[1]{0}', space=sflag, size = 0x4, scoped, tag = 'scoped memory for tpu_custom_call.1']
    #allocation4 [shape = 's32[1]{0}', space=sflag, size = 0x4, scoped, tag = 'scoped memory for tpu_custom_call.1']
    #allocation5 [shape = 'u8[65536]{0}', space=vmem, size = 0x10000, scoped, tag = 'output window, operand 0, single buffered']
    %8 = vsyncpa [#allocation3], 0
    %9 = vsyncpa [#allocation4], 0
    // Predicated region
    $region2: #{tpu_custom_call.1} parent=1 // pred_check
      _
    $region3: #{tpu_custom_call.1} parent=1 // pred_check_branch
      %11 = sbr.rel (0) target = $region5
    $region4: #{tpu_custom_call.1} parent=1 // pred_region
      _
    $region5: #{tpu_custom_call.1} parent=1 // pred_fallthru
      _
    // Predicated region
    $region6: #{tpu_custom_call.1} parent=1 // pred_check
      _
    $region7: #{tpu_custom_call.1} parent=1 // pred_check_branch
      %13 = sbr.rel (0) target = $region9
    $region8: #{tpu_custom_call.1} parent=1 // pred_region
      _
    $region9: #{tpu_custom_call.1} parent=1 // pred_fallthru
      _
    // Predicated region
    $region10: #{tpu_custom_call.1} parent=1 // pred_check
      _
    $region11: #{tpu_custom_call.1} parent=1 // pred_check_branch
      %15 = sbr.rel (0) target = $region13
    $region12: #{tpu_custom_call.1} parent=1 // pred_region
      %17 = vsyncadd [#allocation3], 0
      %s18 = sshll.u32 %s2, 4
      %s19 = int_to_ptr.hbm [resolvable:$true] %s18
      %s20 = sshll.u32 [#allocation2], 4
      %s21 = int_to_ptr.vmem [resolvable:$true] %s20
      %26 = dma.hbm_to_vmem [thread:$0]  %s19, 2048, %s21, [#allocation3], 128, 128, 8
    $region13: #{tpu_custom_call.1} parent=1 // pred_fallthru
      _
    // Predicated region
    $region14: #{tpu_custom_call.1} parent=1 // pred_check
      _
    $region15: #{tpu_custom_call.1} parent=1 // pred_check_branch
      %28 = sbr.rel (0) target = $region17
    $region16: #{tpu_custom_call.1} parent=1 // pred_region
      %30 = dma.done [#allocation3], 2048
    $region17: #{tpu_custom_call.1} parent=1 // pred_fallthru
      _
    %v31 = vld [vmem:[#allocation2] sm:$0xff]
    %v32 = vld [vmem:[#allocation2 + $0x8] sm:$0xff]
    %v33 = vld [vmem:[#allocation2 + $0x10] sm:$0xff]
    %v34 = vld [vmem:[#allocation2 + $0x18] sm:$0xff]
    %v35 = vld [vmem:[#allocation2 + $0x20] sm:$0xff]
    %v36 = vld [vmem:[#allocation2 + $0x28] sm:$0xff]
    %v37 = vld [vmem:[#allocation2 + $0x30] sm:$0xff]
    %v38 = vld [vmem:[#allocation2 + $0x38] sm:$0xff]
    %v39 = vld [vmem:[#allocation2 + $0x40] sm:$0xff]
    %v40 = vld [vmem:[#allocation2 + $0x48] sm:$0xff]
    %v41 = vld [vmem:[#allocation2 + $0x50] sm:$0xff]
    %v42 = vld [vmem:[#allocation2 + $0x58] sm:$0xff]
    %v43 = vld [vmem:[#allocation2 + $0x60] sm:$0xff]
    %v44 = vld [vmem:[#allocation2 + $0x68] sm:$0xff]
    %v45 = vld [vmem:[#allocation2 + $0x70] sm:$0xff]
    %v46 = vld [vmem:[#allocation2 + $0x78] sm:$0xff]
    %v47 = vld [vmem:[%s0] sm:$0x1]
    %v48 = vld [vmem:[%s0 + $0x1] sm:$0x1]
    %v49 = vld [vmem:[%s0 + $0x2] sm:$0x1]
    %v50 = vld [vmem:[%s0 + $0x3] sm:$0x1]
    %v55 = vperm.slane %v47, 0
    %v56 = vperm.slane %v48, 0
    %v57 = vperm.slane %v49, 0
    %v58 = vperm.slane %v50, 0
    %59 = vset.pattern.permute.xlu0 0
    %60 = vperm.xlu0 %59, %v55
    %v61 = vpop.permute.xlu0 %60
    %63 = vset.pattern.permute.xlu0 0
    %64 = vperm.xlu0 %63, %v56
    %v65 = vpop.permute.xlu0 %64
    %67 = vset.pattern.permute.xlu0 0
    %68 = vperm.xlu0 %67, %v57
    %v69 = vpop.permute.xlu0 %68
    %71 = vset.pattern.permute.xlu0 0
    %72 = vperm.xlu0 %71, %v58
    %v73 = vpop.permute.xlu0 %72
    %v75 = vmul.f32 %v31, %v61
    %v76 = vmul.f32 %v32, %v61
    %v77 = vmul.f32 %v33, %v65
    %v78 = vmul.f32 %v34, %v65
    %v79 = vmul.f32 %v35, %v69
    %v80 = vmul.f32 %v36, %v69
    %v81 = vmul.f32 %v37, %v73
    %v82 = vmul.f32 %v38, %v73
    %v83 = vmul.f32 %v39, %v61
    %v84 = vmul.f32 %v40, %v61
    %v85 = vmul.f32 %v41, %v65
    %v86 = vmul.f32 %v42, %v65
    %v87 = vmul.f32 %v43, %v69
    %v88 = vmul.f32 %v44, %v69
    %v89 = vmul.f32 %v45, %v73
    %v90 = vmul.f32 %v46, %v73
    %v91 = vld [vmem:[%s1] sm:$0x1]
    %v92 = vld [vmem:[%s1 + $0x1] sm:$0x1]
    %v93 = vld [vmem:[%s1 + $0x2] sm:$0x1]
    %v94 = vld [vmem:[%s1 + $0x3] sm:$0x1]
    %v99 = vperm.slane %v91, 0
    %v100 = vperm.slane %v92, 0
    %v101 = vperm.slane %v93, 0
    %v102 = vperm.slane %v94, 0
    %103 = vset.pattern.permute.xlu0 0
    %104 = vperm.xlu0 %103, %v99
    %v105 = vpop.permute.xlu0 %104
    %107 = vset.pattern.permute.xlu0 0
    %108 = vperm.xlu0 %107, %v100
    %v109 = vpop.permute.xlu0 %108
    %111 = vset.pattern.permute.xlu0 0
    %112 = vperm.xlu0 %111, %v101
    %v113 = vpop.permute.xlu0 %112
    %115 = vset.pattern.permute.xlu0 0
    %116 = vperm.xlu0 %115, %v102
    %v117 = vpop.permute.xlu0 %116
    %v119 = vadd.f32 %v75, %v105
    %v120 = vadd.f32 %v76, %v105
    %v121 = vadd.f32 %v77, %v109
    %v122 = vadd.f32 %v78, %v109
    %v123 = vadd.f32 %v79, %v113
    %v124 = vadd.f32 %v80, %v113
    %v125 = vadd.f32 %v81, %v117
    %v126 = vadd.f32 %v82, %v117
    %v127 = vadd.f32 %v83, %v105
    %v128 = vadd.f32 %v84, %v105
    %v129 = vadd.f32 %v85, %v109
    %v130 = vadd.f32 %v86, %v109
    %v131 = vadd.f32 %v87, %v113
    %v132 = vadd.f32 %v88, %v113
    %v133 = vadd.f32 %v89, %v117
    %v134 = vadd.f32 %v90, %v117
    %vm135 = vcmask 130048
    %136 = vst.msk [vmem:[#allocation5] sm:$0xff] %vm135, %v119
    %137 = vst.msk [vmem:[#allocation5 + $0x8] sm:$0xff] %vm135, %v120
    %138 = vst.msk [vmem:[#allocation5 + $0x10] sm:$0xff] %vm135, %v121
    %139 = vst.msk [vmem:[#allocation5 + $0x18] sm:$0xff] %vm135, %v122
    %140 = vst.msk [vmem:[#allocation5 + $0x20] sm:$0xff] %vm135, %v123
    %141 = vst.msk [vmem:[#allocation5 + $0x28] sm:$0xff] %vm135, %v124
    %142 = vst.msk [vmem:[#allocation5 + $0x30] sm:$0xff] %vm135, %v125
    %143 = vst.msk [vmem:[#allocation5 + $0x38] sm:$0xff] %vm135, %v126
    %144 = vst.msk [vmem:[#allocation5 + $0x40] sm:$0xff] %vm135, %v127
    %145 = vst.msk [vmem:[#allocation5 + $0x48] sm:$0xff] %vm135, %v128
    %146 = vst.msk [vmem:[#allocation5 + $0x50] sm:$0xff] %vm135, %v129
    %147 = vst.msk [vmem:[#allocation5 + $0x58] sm:$0xff] %vm135, %v130
    %148 = vst.msk [vmem:[#allocation5 + $0x60] sm:$0xff] %vm135, %v131
    %149 = vst.msk [vmem:[#allocation5 + $0x68] sm:$0xff] %vm135, %v132
    %150 = vst.msk [vmem:[#allocation5 + $0x70] sm:$0xff] %vm135, %v133
    %151 = vst.msk [vmem:[#allocation5 + $0x78] sm:$0xff] %vm135, %v134
    // Predicated region
    $region18: #{tpu_custom_call.1} parent=1 // pred_check
      _
    $region19: #{tpu_custom_call.1} parent=1 // pred_check_branch
      %153 = sbr.rel (0) target = $region21
    $region20: #{tpu_custom_call.1} parent=1 // pred_region
      %155 = vsyncadd [#allocation4], 0
      %s156 = sshll.u32 [#allocation5], 4
      %s157 = int_to_ptr.vmem [resolvable:$true] %s156
      %s158 = sshll.u32 %s3, 4
      %s159 = int_to_ptr.hbm [resolvable:$true] %s158
      %164 = dma.vmem_to_hbm [thread:$0]  %s157, 2048, %s159, [#allocation4], 128, 128, 8
    $region21: #{tpu_custom_call.1} parent=1 // pred_fallthru
      _
    // Predicated region
    $region22: #{tpu_custom_call.1} parent=1 // pred_check
      _
    $region23: #{tpu_custom_call.1} parent=1 // pred_check_branch
      %166 = sbr.rel (0) target = $region25
    $region24: #{tpu_custom_call.1} parent=1 // pred_region
      %168 = dma.done [#allocation4], 2048
    $region25: #{tpu_custom_call.1} parent=1 // pred_fallthru
      _
    %169 = vsyncpa [#allocation3], 1
    %170 = vsyncpa [#allocation4], 1

</llo_original>
